<compile_context>
chip_gen: v6e
topology: v6e:2x2x1
jax: 0.10.0
libtpu: 0.0.40
codegen_flags: <defaults>
</compile_context>

<pallas_src>
import jax
import jax.numpy as jnp
from jax.experimental import pallas as pl
from jax.experimental.pallas import tpu as pltpu


def _round_up(x, m):
    return ((x + m - 1) // m) * m


def mlp_softmax_kernel(x_ref, w1_ref, b1_ref, w2_ref, b2_ref, o_ref):
    # ---- Linear 1 (MXU, bf16 operands, f32 accumulate) + f32 bias ----
    h = jnp.dot(x_ref[...], w1_ref[...], preferred_element_type=jnp.float32)
    h = h + b1_ref[...]                                   # (tb, l_mid) f32

    # ---- Sigmoid: exp + approx reciprocal both run on the EUP slot ----
    h = pl.reciprocal(1.0 + jnp.exp(-h), approx=True)     # in [0, 1]

    # ---- Linear 2: bf16 x bf16 MXU dot (h cast down), f32 accumulate ----
    logits = jnp.dot(h.astype(w2_ref.dtype), w2_ref[...],
                     preferred_element_type=jnp.float32)  # (tb, l_out_pad)
    logits = logits + b2_ref[...]                         # padded lanes -> -1e30

    # ---- Numerically stable softmax over the lane-dense (padded) last dim ----
    m = jnp.max(logits, axis=-1, keepdims=True)
    e = jnp.exp(logits - m)                               # padded lanes exp -> 0
    denom = jnp.sum(e, axis=-1, keepdims=True)
    o_ref[...] = (e * pl.reciprocal(denom, approx=True)).astype(o_ref.dtype)


def prepare_params(w1_t, b1, w2_t, b2, *, param_dtype=jnp.bfloat16):
    """Hoisted, call-once preprocessing: cast weights and build the lane-dense
    padded second linear.  b2 padding stays float32 (-1e30) so padded logits
    underflow to exactly 0 in the softmax."""
    l_in, l_mid = w1_t.shape
    l_out = w2_t.shape[1]
    l_out_pad = _round_up(max(l_out, 128), 128)

    w1_c = w1_t.astype(param_dtype)
    b1_c = jnp.reshape(b1, (1, l_mid)).astype(jnp.float32)
    w2_pad = jnp.zeros((l_mid, l_out_pad), param_dtype).at[:, :l_out].set(
        w2_t.astype(param_dtype))
    b2_pad = jnp.full((1, l_out_pad), -1e30, jnp.float32).at[:, :l_out].set(
        jnp.reshape(b2, (-1,)).astype(jnp.float32))
    return w1_c, b1_c, w2_pad, b2_pad


def mlp_softmax_prepared(x, w1_c, b1_c, w2_pad, b2_pad, l_out,
                         *, tb=None, out_bf16=None):
    """Hot path. x: (B, l_in). Weights already cast/padded by prepare_params.
    Returns softmax probabilities (B, l_out) in float32."""
    B, l_in = x.shape
    l_mid = w1_c.shape[1]
    l_out_pad = w2_pad.shape[1]
    in_dtype = w1_c.dtype

    # ---- Batch tile: single step for tiny B (dispatch-bound), >=2 parallel
    # steps once B > 128 (feeds both v7x TensorCores), capped at 512 rows so
    # the double-buffered blocks stay well inside v7x's 64 MiB VMEM. ----
    if tb is None:
        if B <= 128:
            tb = B
        else:
            tb = min(512, _round_up(-(-B // 2), 16))
    Bp = _round_up(B, tb)
    n_steps = Bp // tb

    # Output slab dtype: bf16 when large-B / memory-bound (halves the padded
    # 128-lane writeback); upcast back to f32 after slicing.
    if out_bf16 is None:
        out_bf16 = B >= 4096
    out_dtype = jnp.bfloat16 if out_bf16 else jnp.float32

    x_c = x.astype(in_dtype)
    if Bp != B:
        x_c = jnp.pad(x_c, ((0, Bp - B), (0, 0)))

    # Grid-invariant operands: single-buffer them when there is >1 grid step
    # (default double-buffering would just waste VMEM on never-refetched data).
    if n_steps > 1:
        def wspec(shape):
            return pl.BlockSpec(shape, lambda i: (0, 0),
                                pipeline_mode=pl.Buffered(1))
    else:
        def wspec(shape):
            return pl.BlockSpec(shape, lambda i: (0, 0))

    # Raise the scoped VMEM limit only when the estimated footprint needs it
    # (large l_in / l_mid); leave defaults for the small, tested shapes.
    in_b = jnp.dtype(in_dtype).itemsize
    out_b = jnp.dtype(out_dtype).itemsize
    wbuf = 1 if n_steps > 1 else 2
    est = (2 * tb * l_in * in_b                       # x, double-buffered
           + 2 * tb * l_out_pad * out_b               # out, double-buffered
           + (l_in * l_mid + l_mid * l_out_pad) * in_b * wbuf
           + (l_mid + l_out_pad) * 4 * wbuf
           + 6 * tb * max(l_mid, l_out_pad) * 4)      # f32 temporaries headroom
    vmem_limit = None
    if est > (24 << 20):
        vmem_limit = min(int(est) + (8 << 20), 64 << 20)

    out = pl.pallas_call(
        mlp_softmax_kernel,
        out_shape=jax.ShapeDtypeStruct((Bp, l_out_pad), out_dtype),
        grid_spec=pltpu.PrefetchScalarGridSpec(
            num_scalar_prefetch=0,
            grid=(n_steps,),
            in_specs=[
                pl.BlockSpec((tb, l_in), lambda i: (i, 0)),   # x tile
                wspec((l_in, l_mid)),                         # W1^T (resident)
                wspec((1, l_mid)),                            # b1
                wspec((l_mid, l_out_pad)),                    # W2^T padded
                wspec((1, l_out_pad)),                        # b2 padded (f32)
            ],
            out_specs=pl.BlockSpec((tb, l_out_pad), lambda i: (i, 0)),
        ),
        compiler_params=pltpu.CompilerParams(
            dimension_semantics=("parallel",),
            vmem_limit_bytes=vmem_limit,
        ),
    )(x_c, w1_c, b1_c, w2_pad, b2_pad)

    out = out[:B, :l_out]
    if out_bf16:
        out = out.astype(jnp.float32)
    return out


def mlp_softmax(x, w1_t, b1, w2_t, b2, *, tb=None):
    """Convenience one-shot wrapper (prepares params every call).  For real
    use, call prepare_params() once and jit mlp_softmax_prepared."""
    l_out = w2_t.shape[1]
    params = prepare_params(w1_t, b1, w2_t, b2)
    return mlp_softmax_prepared(x, *params, l_out, tb=tb)


def init_linear_params(key, fan_in, fan_out):
    """Deterministic init mimicking PyTorch nn.Linear default: U(-1/sqrt(fan_in), ...)."""
    kw, kb = jax.random.split(key)
    bound = 1.0 / jnp.sqrt(jnp.float32(fan_in))
    # PyTorch weight is (out, in); we store the transpose (in, out) for the kernel.
    w_t = jax.random.uniform(kw, (fan_in, fan_out), jnp.float32, -bound, bound)
    b = jax.random.uniform(kb, (1, fan_out), jnp.float32, -bound, bound)
    return w_t, b


if __name__ == "__main__":
    # Small shapes consistent with the module: x is (batch, l_in).
    batch, l_in, l_mid, l_out = 16, 32, 64, 16

    key = jax.random.PRNGKey(0)
    kx, k1, k2 = jax.random.split(key, 3)

    x = jax.random.normal(kx, (batch, l_in), jnp.float32)
    w1_t, b1 = init_linear_params(k1, l_in, l_mid)
    w2_t, b2 = init_linear_params(k2, l_mid, l_out)

    # Hoisted path: pad/cast weights once, jit the apply so the x cast and the
    # output slice fuse with the pallas_call (no per-call un-hidden XLA ops).
    params = prepare_params(w1_t, b1, w2_t, b2)
    fwd = jax.jit(lambda xin: mlp_softmax_prepared(xin, *params, l_out))

    out = fwd(x)
    out = jax.block_until_ready(out)

    # Reference: same math as the PyTorch module, full f32.
    ref = jax.nn.softmax(jax.nn.sigmoid(x @ w1_t + b1) @ w2_t + b2, axis=-1)

    assert out.shape == (batch, l_out)
    # Tolerances account for bf16 inputs/activations + approx (EUP) reciprocals.
    assert jnp.allclose(out, ref, atol=3e-2), float(jnp.max(jnp.abs(out - ref)))
    assert jnp.allclose(jnp.sum(out, axis=-1), 1.0, atol=5e-3)

    print("KERNEL_OK")
</pallas_src>

<mosaic_0001>
module attributes {stable_mosaic.version = 11 : i64} {
  func.func @mlp_softmax_kernel(%arg0: i32, %arg1: memref<16x32xbf16, #tpu.memory_space<vmem>>, %arg2: memref<32x64xbf16, #tpu.memory_space<vmem>>, %arg3: memref<1x64xf32, #tpu.memory_space<vmem>>, %arg4: memref<64x128xbf16, #tpu.memory_space<vmem>>, %arg5: memref<1x128xf32, #tpu.memory_space<vmem>>, %arg6: memref<16x128xf32, #tpu.memory_space<vmem>>) attributes {dimension_semantics = [#tpu.dimension_semantics<parallel>], iteration_bounds = array<i64: 1>, scalar_prefetch = 0 : i64, scratch_operands = 0 : i64, tpu.core_type = #tpu.core_type<tc>, window_params = [{transform_indices = @transform_0, window_bounds = array<i64: 16, 32>}, {pipeline_mode = #tpu.pipeline_mode<synchronous>, transform_indices = @transform_1, window_bounds = array<i64: 32, 64>}, {pipeline_mode = #tpu.pipeline_mode<synchronous>, transform_indices = @transform_2, window_bounds = array<i64: 1, 64>}, {pipeline_mode = #tpu.pipeline_mode<synchronous>, transform_indices = @transform_3, window_bounds = array<i64: 64, 128>}, {pipeline_mode = #tpu.pipeline_mode<synchronous>, transform_indices = @transform_4, window_bounds = array<i64: 1, 128>}, {transform_indices = @transform_5, window_bounds = array<i64: 16, 128>}]} {
    %c0 = arith.constant 0 : index
    %c0_0 = arith.constant 0 : index
    %0 = vector.load %arg1[%c0, %c0_0] : memref<16x32xbf16, #tpu.memory_space<vmem>>, vector<16x32xbf16>
    %c0_1 = arith.constant 0 : index
    %c0_2 = arith.constant 0 : index
    %1 = vector.load %arg2[%c0_1, %c0_2] : memref<32x64xbf16, #tpu.memory_space<vmem>>, vector<32x64xbf16>
    %cst = arith.constant dense<0.000000e+00> : vector<16x64xf32>
    %2 = tpu.matmul %0, %1, %cst {dimension_numbers = #tpu.dot_dimension_numbers<[1], [0], [0], [1], [0, 0, 1, 1], [], []>} : vector<16x32xbf16>, vector<32x64xbf16>, vector<16x64xf32> -> vector<16x64xf32>
    %c0_3 = arith.constant 0 : index
    %c0_4 = arith.constant 0 : index
    %3 = vector.load %arg3[%c0_3, %c0_4] : memref<1x64xf32, #tpu.memory_space<vmem>>, vector<1x64xf32>
    %4 = vector.broadcast %3 : vector<1x64xf32> to vector<16x64xf32>
    %5 = arith.addf %2, %4 : vector<16x64xf32>
    %cst_5 = arith.constant 0.000000e+00 : f32
    %6 = vector.broadcast %cst_5 : f32 to vector<16x64xf32>
    %7 = arith.subf %6, %5 : vector<16x64xf32>
    %8 = math.exp %7 : vector<16x64xf32>
    %cst_6 = arith.constant 1.000000e+00 : f32
    %9 = vector.broadcast %cst_6 : f32 to vector<16x64xf32>
    %10 = arith.addf %9, %8 : vector<16x64xf32>
    %11 = tpu.reciprocal %10 {approx = true} : vector<16x64xf32> -> vector<16x64xf32>
    %12 = arith.truncf %11 : vector<16x64xf32> to vector<16x64xbf16>
    %c0_7 = arith.constant 0 : index
    %c0_8 = arith.constant 0 : index
    %13 = vector.load %arg4[%c0_7, %c0_8] : memref<64x128xbf16, #tpu.memory_space<vmem>>, vector<64x128xbf16>
    %cst_9 = arith.constant dense<0.000000e+00> : vector<16x128xf32>
    %14 = tpu.matmul %12, %13, %cst_9 {dimension_numbers = #tpu.dot_dimension_numbers<[1], [0], [0], [1], [0, 0, 1, 1], [], []>} : vector<16x64xbf16>, vector<64x128xbf16>, vector<16x128xf32> -> vector<16x128xf32>
    %c0_10 = arith.constant 0 : index
    %c0_11 = arith.constant 0 : index
    %15 = vector.load %arg5[%c0_10, %c0_11] : memref<1x128xf32, #tpu.memory_space<vmem>>, vector<1x128xf32>
    %16 = vector.broadcast %15 : vector<1x128xf32> to vector<16x128xf32>
    %17 = arith.addf %14, %16 : vector<16x128xf32>
    %cst_12 = arith.constant dense<0xFF800000> : vector<16xf32>
    %18 = vector.multi_reduction <maximumf>, %17, %cst_12 [1] : vector<16x128xf32> to vector<16xf32>
    %19 = vector.shape_cast %18 : vector<16xf32> to vector<16x1xf32>
    %20 = vector.broadcast %19 : vector<16x1xf32> to vector<16x128xf32>
    %21 = arith.subf %17, %20 : vector<16x128xf32>
    %22 = math.exp %21 : vector<16x128xf32>
    %cst_13 = arith.constant dense<0.000000e+00> : vector<16xf32>
    %23 = vector.multi_reduction <add>, %22, %cst_13 [1] : vector<16x128xf32> to vector<16xf32>
    %24 = vector.shape_cast %23 : vector<16xf32> to vector<16x1xf32>
    %25 = tpu.reciprocal %24 {approx = true} : vector<16x1xf32> -> vector<16x1xf32>
    %26 = vector.broadcast %25 : vector<16x1xf32> to vector<16x128xf32>
    %27 = arith.mulf %22, %26 : vector<16x128xf32>
    %c0_14 = arith.constant 0 : index
    %c0_15 = arith.constant 0 : index
    %28 = vector.load %arg6[%c0_14, %c0_15] : memref<16x128xf32, #tpu.memory_space<vmem>>, vector<16x128xf32>
    tpu.vector_store %arg6[%c0_14, %c0_15], %27 {strides = array<i32>} : memref<16x128xf32, #tpu.memory_space<vmem>>, vector<16x128xf32>,
    return
  }
  func.func @transform_0(%arg0: i32) -> (i32, i32) {
    %c0_i32 = arith.constant 0 : i32
    %c0_i32_0 = arith.constant 0 : i32
    return %arg0, %c0_i32 : i32, i32
  }
  func.func @transform_1(%arg0: i32) -> (i32, i32) {
    %c0_i32 = arith.constant 0 : i32
    %c0_i32_0 = arith.constant 0 : i32
    %c0_i32_1 = arith.constant 0 : i32
    return %c0_i32, %c0_i32_0 : i32, i32
  }
  func.func @transform_2(%arg0: i32) -> (i32, i32) {
    %c0_i32 = arith.constant 0 : i32
    %c0_i32_0 = arith.constant 0 : i32
    %c0_i32_1 = arith.constant 0 : i32
    return %c0_i32, %c0_i32_0 : i32, i32
  }
  func.func @transform_3(%arg0: i32) -> (i32, i32) {
    %c0_i32 = arith.constant 0 : i32
    %c0_i32_0 = arith.constant 0 : i32
    %c0_i32_1 = arith.constant 0 : i32
    return %c0_i32, %c0_i32_0 : i32, i32
  }
  func.func @transform_4(%arg0: i32) -> (i32, i32) {
    %c0_i32 = arith.constant 0 : i32
    %c0_i32_0 = arith.constant 0 : i32
    %c0_i32_1 = arith.constant 0 : i32
    return %c0_i32, %c0_i32_0 : i32, i32
  }
  func.func @transform_5(%arg0: i32) -> (i32, i32) {
    %c0_i32 = arith.constant 0 : i32
    %c0_i32_0 = arith.constant 0 : i32
    return %arg0, %c0_i32 : i32, i32
  }
}

</mosaic_0001>

<llo_original>
// kernel: _lambda_.1
$region0: #{_lambda_.1}
  #allocation0 [shape = 'u32[]', space=smem, size = 0x4, offset = 0x4, fixed_abs, tag = 'smem constant byte address 0x4 - core index']
  #allocation1 [shape = 'u32[144,128]{1,0:T(1,128)}', space=vmem, size = 0x12000, scoped, tag = 'internal scratch']
  %s0 = inlined_call_operand.vmem [shape: bf16[16,32], index: 0, kind: input, shape index: {}]
  %s1 = inlined_call_operand.vmem [shape: bf16[32,64], index: 1, kind: input, shape index: {}]
  %s2 = inlined_call_operand.vmem [shape: f32[1,64], index: 2, kind: input, shape index: {}]
  %s3 = inlined_call_operand.hbm [shape: bf16[64,128], index: 3, kind: input, shape index: {}]
  %s4 = inlined_call_operand.vmem [shape: f32[1,128], index: 4, kind: input, shape index: {}]
  %s5 = inlined_call_operand.hbm [shape: f32[16,128], index: 5, kind: output, shape index: {}]
  %s6 = sld [smem:[#allocation0]]
  $region34: #{_lambda_.1} parent=0
    _
  %s8 = ssub.s32 1, %s6
  %s9 = scalar_select 0, %s8, %s6
  $region1: #{_lambda_.1} parent=0
    #allocation2 [shape = 'u8[16384]{0}', space=vmem, size = 0x4000, scoped, tag = 'input window, operand 3, single buffered']
    #allocation3 [shape = 's32[1]{0}', space=sflag, size = 0x4, scoped, tag = 'scoped memory for _lambda_.1']
    #allocation4 [shape = 's32[1]{0}', space=sflag, size = 0x4, scoped, tag = 'scoped memory for _lambda_.1']
    #allocation5 [shape = 'u8[8192]{0}', space=vmem, size = 0x2000, scoped, tag = 'output window, operand 0, single buffered']
    %10 = vsyncpa [#allocation3], 0
    %11 = vsyncpa [#allocation4], 0
    // Predicated region
    $region2: #{_lambda_.1} parent=1 // pred_check
      _
    $region3: #{_lambda_.1} parent=1 // pred_check_branch
      %13 = sbr.rel (0) target = $region5
    $region4: #{_lambda_.1} parent=1 // pred_region
      _
    $region5: #{_lambda_.1} parent=1 // pred_fallthru
      _
    // Predicated region
    $region6: #{_lambda_.1} parent=1 // pred_check
      _
    $region7: #{_lambda_.1} parent=1 // pred_check_branch
      %15 = sbr.rel (0) target = $region9
    $region8: #{_lambda_.1} parent=1 // pred_region
      _
    $region9: #{_lambda_.1} parent=1 // pred_fallthru
      _
    // Predicated region
    $region10: #{_lambda_.1} parent=1 // pred_check
      _
    $region11: #{_lambda_.1} parent=1 // pred_check_branch
      %17 = sbr.rel (0) target = $region13
    $region12: #{_lambda_.1} parent=1 // pred_region
      _
    $region13: #{_lambda_.1} parent=1 // pred_fallthru
      _
    // Predicated region
    $region14: #{_lambda_.1} parent=1 // pred_check
      _
    $region15: #{_lambda_.1} parent=1 // pred_check_branch
      %19 = sbr.rel (0) target = $region17
    $region16: #{_lambda_.1} parent=1 // pred_region
      %s21 = ssub.s32 512, 512
      %22 = vsyncadd [#allocation3], %s21
      %s23 = sshll.u32 [#allocation2], 4
      %s24 = int_to_ptr.vmem [resolvable:$true] %s23
      %29 = dma.hbm_to_vmem [thread:$0]  %s3, 512, %s24, [#allocation3], 64, 64, 4
    $region17: #{_lambda_.1} parent=1 // pred_fallthru
      _
    // Predicated region
    $region18: #{_lambda_.1} parent=1 // pred_check
      _
    $region19: #{_lambda_.1} parent=1 // pred_check_branch
      %31 = sbr.rel (0) target = $region21
    $region20: #{_lambda_.1} parent=1 // pred_region
      _
    $region21: #{_lambda_.1} parent=1 // pred_fallthru
      _
    // Predicated region
    $region22: #{_lambda_.1} parent=1 // pred_check
      _
    $region23: #{_lambda_.1} parent=1 // pred_check_branch
      %33 = sbr.rel (0) target = $region25
    $region24: #{_lambda_.1} parent=1 // pred_region
      %34 = dma.done [#allocation3], 512
    $region25: #{_lambda_.1} parent=1 // pred_fallthru
      _
    %v36 = vld [vmem:[%s0] sm:$0xf]
    %v37 = vld [vmem:[%s0 + $0x4] sm:$0xf]
    %v38 = vld [vmem:[%s1] sm:$0xf]
    %v39 = vld [vmem:[%s1 + $0x4] sm:$0xf]
    %v40 = vld [vmem:[%s1 + $0x8] sm:$0xf]
    %v41 = vld [vmem:[%s1 + $0xc] sm:$0xf]
    %v42 = vld [vmem:[%s2] sm:$0x1]
    %v44 = vlaneseq
    %v45 = vshrl.u32 %v44, 7
    %v46 = vsub.s32 0, %v45
    %v47 = vrot.slane %v42, %v46
    %v51 = vunpack.c.l.b16 %v36
    %v52 = vunpack.c.l.b16 %v37
    %v53 = vpack.c.b16 %v52, %v51
    %v58 = vunpack.c.l.b16 %v38
    %v59 = vunpack.c.l.b16 %v39
    %v60 = vunpack.c.l.b16 %v40
    %v61 = vunpack.c.l.b16 %v41
    %v62 = vpack.c.b16 %v59, %v58
    %v63 = vpack.c.b16 %v61, %v60
    %vm66 = vcmask 261120
    %v68 = vsel %vm66, %v53, 0
    %70 = vmatprep.subr.bf16.mxu0 0
    %71 = vmatpush1.bf16.msra.mxu0 0
    %72 = vmatprep.subr.bf16.mxu0 0
    %73 = vmatpush1.bf16.msra.mxu0 0
    %74 = vmatprep.subr.bf16.mxu0 0
    %75 = vmatpush1.bf16.msra.mxu0 0
    %76 = vmatprep.subr.bf16.mxu0 0
    %77 = vmatpush1.bf16.msra.mxu0 0
    %78 = vmatprep.subr.bf16.mxu0 0
    %79 = vmatpush1.bf16.msra.mxu0 0
    %80 = vmatprep.subr.bf16.mxu0 0
    %81 = vmatpush1.bf16.msra.mxu0 0
    %82 = vmatprep.subr.bf16.mxu0 0
    %83 = vmatpush1.bf16.msra.mxu0 %v63
    %84 = vmatprep.subr.bf16.mxu0 0
    %85 = vmatpush1.bf16.msra.mxu0 %v62
    %86 = vmatprep.subr.bf16.mxu0 0
    %87 = vmatpush2.bf16.msra.mxu0 0
    %88 = vmatprep.subr.bf16.mxu0 0
    %89 = vmatpush2.bf16.msra.mxu0 0
    %90 = vmatprep.subr.bf16.mxu0 0
    %91 = vmatpush2.bf16.msra.mxu0 0
    %92 = vmatprep.subr.bf16.mxu0 0
    %93 = vmatpush2.bf16.msra.mxu0 0
    %94 = vmatprep.subr.bf16.mxu0 0
    %95 = vmatpush2.bf16.msra.mxu0 0
    %96 = vmatprep.subr.bf16.mxu0 0
    %97 = vmatpush2.bf16.msra.mxu0 0
    %98 = vmatprep.subr.bf16.mxu0 0
    %99 = vmatpush2.bf16.msra.mxu0 0
    %100 = vmatprep.subr.bf16.mxu0 0
    %101 = vmatpush2.bf16.msra.mxu0 0
    %102 = vmatprep.mubr.bf16.mxu0 0
    %103 = vmatmul.mubr.bf16.gmra.mxu0 %v68
    %v104 = vpop.f32.mrf.mxu0
    %v105 = vadd.f32 %v47, %v104
    %v106 = vpop.f32.mrf.mxu0
    %v107 = vpop.f32.mrf.mxu0
    %v108 = vadd.f32 %v47, %v107
    %v109 = vpop.f32.mrf.mxu0
    %110 = vdwg.mxu0
    %v111 = vsub.f32 0.0, %v105
    %v112 = vsub.f32 0.0, %v108
    %v113 = vmul.f32 %v111, 1.442695
    %v114 = vpow.pop %v113
    %v115 = vmul.f32 %v112, 1.442695
    %v116 = vpow.pop %v115
    %v117 = vadd.f32 %v114, 1.0
    %v118 = vadd.f32 %v116, 1.0
    %v119 = vrcp.pop %v117
    %v120 = vrcp.pop %v118
    %v121 = vpack.c.bf16 %v120, %v119
    %v122 = vld [vmem:[#allocation2] sm:$0xf]
    %v123 = vld [vmem:[#allocation2 + $0x4] sm:$0xf]
    %v124 = vld [vmem:[#allocation2 + $0x8] sm:$0xf]
    %v125 = vld [vmem:[#allocation2 + $0xc] sm:$0xf]
    %v126 = vld [vmem:[#allocation2 + $0x10] sm:$0xf]
    %v127 = vld [vmem:[#allocation2 + $0x14] sm:$0xf]
    %v128 = vld [vmem:[#allocation2 + $0x18] sm:$0xf]
    %v129 = vld [vmem:[#allocation2 + $0x1c] sm:$0xf]
    %v130 = vld [vmem:[%s4] sm:$0x1]
    %v132 = vlaneseq
    %v133 = vshrl.u32 %v132, 7
    %v134 = vsub.s32 0, %v133
    %v135 = vrot.slane %v130, %v134
    %v145 = vunpack.c.l.b16 %v122
    %v146 = vunpack.c.l.b16 %v123
    %v147 = vunpack.c.l.b16 %v124
    %v148 = vunpack.c.l.b16 %v125
    %v149 = vunpack.c.l.b16 %v126
    %v150 = vunpack.c.l.b16 %v127
    %v151 = vunpack.c.l.b16 %v128
    %v152 = vunpack.c.l.b16 %v129
    %v153 = vpack.c.b16 %v146, %v145
    %v154 = vpack.c.b16 %v148, %v147
    %v155 = vpack.c.b16 %v150, %v149
    %v156 = vpack.c.b16 %v152, %v151
    %vm161 = vcmask 523264
    %v163 = vsel %vm161, %v121, 0
    %165 = vmatprep.subr.bf16.mxu0 0
    %166 = vmatpush1.bf16.msra.mxu0 0
    %167 = vmatprep.subr.bf16.mxu0 0
    %168 = vmatpush1.bf16.msra.mxu0 0
    %169 = vmatprep.subr.bf16.mxu0 0
    %170 = vmatpush1.bf16.msra.mxu0 0
    %171 = vmatprep.subr.bf16.mxu0 0
    %172 = vmatpush1.bf16.msra.mxu0 0
    %173 = vmatprep.subr.bf16.mxu0 0
    %174 = vmatpush1.bf16.msra.mxu0 %v156
    %175 = vmatprep.subr.bf16.mxu0 0
    %176 = vmatpush1.bf16.msra.mxu0 %v155
    %177 = vmatprep.subr.bf16.mxu0 0
    %178 = vmatpush1.bf16.msra.mxu0 %v154
    %179 = vmatprep.subr.bf16.mxu0 0
    %180 = vmatpush1.bf16.msra.mxu0 %v153
    %181 = vmatprep.subr.bf16.mxu0 0
    %182 = vmatpush2.bf16.msra.mxu0 0
    %183 = vmatprep.subr.bf16.mxu0 0
    %184 = vmatpush2.bf16.msra.mxu0 0
    %185 = vmatprep.subr.bf16.mxu0 0
    %186 = vmatpush2.bf16.msra.mxu0 0
    %187 = vmatprep.subr.bf16.mxu0 0
    %188 = vmatpush2.bf16.msra.mxu0 0
    %189 = vmatprep.subr.bf16.mxu0 0
    %190 = vmatpush2.bf16.msra.mxu0 0
    %191 = vmatprep.subr.bf16.mxu0 0
    %192 = vmatpush2.bf16.msra.mxu0 0
    %193 = vmatprep.subr.bf16.mxu0 0
    %194 = vmatpush2.bf16.msra.mxu0 0
    %195 = vmatprep.subr.bf16.mxu0 0
    %196 = vmatpush2.bf16.msra.mxu0 0
    %197 = vmatprep.mubr.bf16.mxu0 0
    %198 = vmatmul.mubr.bf16.gmra.mxu0 %v163
    %v199 = vpop.f32.mrf.mxu0
    %v200 = vadd.f32 %v135, %v199
    %v201 = vpop.f32.mrf.mxu0
    %v202 = vpop.f32.mrf.mxu0
    %v203 = vadd.f32 %v135, %v202
    %v204 = vpop.f32.mrf.mxu0
    %205 = vdwg.mxu0
    %206 = vmax.xlane.f32.xlu0 %v200
    %v207 = vpop.xlane.xlu0 %206
    %208 = vmax.xlane.f32.xlu0 %v203
    %v209 = vpop.xlane.xlu0 %208
    %v210 = vsub.f32 %v200, %v207
    %v211 = vsub.f32 %v203, %v209
    %v212 = vmul.f32 %v210, 1.442695
    %v213 = vpow.pop %v212
    %v214 = vmul.f32 %v211, 1.442695
    %v215 = vpow.pop %v214
    %216 = vadd.xlane.f32.xlu0 %v213
    %v217 = vpop.xlane.xlu0 %216
    %218 = vadd.xlane.f32.xlu0 %v215
    %v219 = vpop.xlane.xlu0 %218
    %v220 = vrcp.pop %v217
    %v221 = vrcp.pop %v219
    %v222 = vmul.f32 %v213, %v220
    %v223 = vmul.f32 %v215, %v221
    %224 = vst [vmem:[#allocation5] sm:$0xff] %v222
    %225 = vst [vmem:[#allocation5 + $0x8] sm:$0xff] %v223
    // Predicated region
    $region26: #{_lambda_.1} parent=1 // pred_check
      _
    $region27: #{_lambda_.1} parent=1 // pred_check_branch
      %227 = sbr.rel (0) target = $region29
    $region28: #{_lambda_.1} parent=1 // pred_region
      %s229 = ssub.s32 256, 256
      %230 = vsyncadd [#allocation4], %s229
      %s231 = sshll.u32 [#allocation5], 4
      %s232 = int_to_ptr.vmem [resolvable:$true] %s231
      %237 = dma.vmem_to_hbm [thread:$0]  %s232, 256, %s5, [#allocation4], 128, 128, 8
    $region29: #{_lambda_.1} parent=1 // pred_fallthru
      _
    // Predicated region
    $region30: #{_lambda_.1} parent=1 // pred_check
      _
    $region31: #{_lambda_.1} parent=1 // pred_check_branch
      %239 = sbr.rel (0) target = $region33
    $region32: #{_lambda_.1} parent=1 // pred_region
      %240 = dma.done [#allocation4], 256
    $region33: #{_lambda_.1} parent=1 // pred_fallthru
      _
    %241 = vsyncpa [#allocation3], 1
    %242 = vsyncpa [#allocation4], 1

</llo_original>
